<compile_context>
chip_gen: v6e
topology: v6e:2x2x1
jax: 0.10.0
libtpu: 0.0.40
codegen_flags: <defaults>
</compile_context>

<pallas_src>
import jax
import jax.numpy as jnp
from jax import lax
from jax.experimental import pallas as pl
from jax.experimental.pallas import tpu as pltpu

BN_EPS = 1e-5
ROW0 = 8  # interior row offset (sublane-tile aligned) for padded/staged slabs


def _fold_conv_weight(w_oihw, W, C):
    """(Cout, Cin, 3, 3) -> (3, W*C, W*C): one banded block per ky tap.

    Row index of each block = (w_in, ci), column index = (w_out, co).  The kx
    taps and the zero padding along W are encoded in the band structure, so a
    3x3 conv becomes three (N*H, WC) @ (WC, WC) matmuls (one per ky tap).
    """
    wt = jnp.transpose(w_oihw.astype(jnp.float32), (2, 3, 1, 0))  # (ky,kx,ci,co)
    blocks = []
    for ky in range(3):
        bky = jnp.zeros((W * C, W * C), jnp.float32)
        for kx in range(3):
            # S[w_in, w_out] = 1 iff w_in = w_out + kx - 1 (missing taps at
            # the W borders encode the zero padding).
            S = jnp.eye(W, k=1 - kx, dtype=jnp.float32)
            bky = bky + jnp.kron(S, wt[ky, kx])
        blocks.append(bky)
    return jnp.stack(blocks, axis=0)  # (3, WC, WC)


def resbridge_forward(x_nchw, params):
    """x_nchw: (N, C, H, W) float32, PyTorch layout. Returns (N, C, H, W)."""
    x_nchw = x_nchw.astype(jnp.float32)
    N, C, H, W = x_nchw.shape
    WC = W * C
    NH = N * H
    assert WC == 128, "kernel assumes W*C == 128 (one lane tile)"
    assert W & (W - 1) == 0, "lane roll-add reduction assumes W is a power of 2"
    assert H % 8 == 0, "kernel assumes H is a multiple of the sublane tile"

    # Pack NCHW -> (N, H, W*C) (lane-dense) and pre-pad along H so the interior
    # starts at a sublane-tile boundary (row ROW0).
    # TODO(synk): keep tensors in this packed layout across adjacent ops to
    # drop the NCHW<->packed transposes when integrating into a full model.
    x_pk = jnp.transpose(x_nchw, (0, 2, 3, 1)).reshape(N, H, WC)
    x_pad = jnp.pad(x_pk, ((0, 0), (ROW0, 1), (0, 0)))      # (N, ROW0+H+1, WC)

    # Folded conv weights packed as one slab: (6, WC, WC) = [conv1 ky0..2,
    # conv2 ky0..2].
    wbs = jnp.concatenate(
        [_fold_conv_weight(params["w1"], W, C),
         _fold_conv_weight(params["w2"], W, C)], axis=0)

    def tile_c(v):  # (C,) -> (1, W*C) matching the (w, c) lane packing
        return jnp.tile(v.reshape(1, C).astype(jnp.float32), (1, W))

    # BN params packed into a single (4, WC) slab: [g1, b1, g2, b2].
    bnp = jnp.concatenate(
        [tile_c(params["g1"]), tile_c(params["b1"]),
         tile_c(params["g2"]), tile_c(params["b2"])], axis=0)

    inv_count = 1.0 / float(NH * W)

    def kernel(xp_ref, wbs_ref, bnp_ref, o_ref, apad_ref):

        def conv3x3(p_ref, widx):
            # p_ref holds an H-zero-padded activation whose interior rows are
            # [ROW0, ROW0+H).  Three ky windows, each one (NH, WC) @ (WC, WC)
            # MXU dot against the banded folded weight block.
            up = p_ref[:, ROW0 - 1:ROW0 - 1 + H, :].reshape(NH, WC)
            ce = p_ref[:, ROW0:ROW0 + H, :].reshape(NH, WC)        # aligned
            dn = p_ref[:, ROW0 + 1:ROW0 + 1 + H, :].reshape(NH, WC)
            y = jnp.dot(up, wbs_ref[3 * widx + 0],
                        preferred_element_type=jnp.float32)
            y = y + jnp.dot(ce, wbs_ref[3 * widx + 1],
                            preferred_element_type=jnp.float32)
            y = y + jnp.dot(dn, wbs_ref[3 * widx + 2],
                            preferred_element_type=jnp.float32)
            return y, ce                                           # (NH, WC)

        def batchnorm(y, g, b):
            # Training-mode BatchNorm2d as a single fused affine.
            # Stats = [sum(y); sum(y*y)] in one (2, WC) block; per-channel
            # sum + broadcast over the W lane-groups (lane = w*C + c) is
            # log2(W) cyclic lane roll-adds on the XLU.
            stats = jnp.concatenate(
                [jnp.sum(y, axis=0, keepdims=True),
                 jnp.sum(y * y, axis=0, keepdims=True)], axis=0)   # (2, WC)
            amt = C
            while amt < WC:
                stats = stats + pltpu.roll(stats, shift=amt, axis=1)
                amt *= 2
            mean = stats[0:1, :] * inv_count                       # (1, WC)
            var = stats[1:2, :] * inv_count - mean * mean          # E[y^2]-m^2
            scale = g * lax.rsqrt(var + BN_EPS)                    # (1, WC)
            offset = b - mean * scale                              # (1, WC)
            return y * scale + offset

        # --- conv1 -> BN1 -> ReLU (input pre-padded & aligned by wrapper) ---
        y1, x_ce = conv3x3(xp_ref, 0)
        a = jnp.maximum(batchnorm(y1, bnp_ref[0:1, :], bnp_ref[1:2, :]), 0.0)

        # --- stage activation for conv2: zero ONLY the two halo rows, write
        #     the interior once at a sublane-tile boundary (aligned store). ---
        zrow = jnp.zeros((N, 1, WC), jnp.float32)
        apad_ref[:, ROW0 - 1:ROW0, :] = zrow
        apad_ref[:, ROW0 + H:ROW0 + H + 1, :] = zrow
        apad_ref[:, ROW0:ROW0 + H, :] = a.reshape(N, H, WC)

        # --- conv2 -> BN2 ---
        y2, _ = conv3x3(apad_ref, 1)
        z = batchnorm(y2, bnp_ref[2:3, :], bnp_ref[3:4, :])

        # --- residual add: conv1's aligned center window IS the input x ---
        o_ref[...] = (x_ce + z).reshape(N, H, WC)

    vmem = pl.BlockSpec(memory_space=pltpu.MemorySpace.VMEM)
    out_pk = pl.pallas_call(
        kernel,
        out_shape=jax.ShapeDtypeStruct((N, H, WC), jnp.float32),
        in_specs=[vmem, vmem, vmem],
        out_specs=vmem,
        scratch_shapes=[pltpu.VMEM((N, ROW0 + H + 1, WC), jnp.float32)],
    )(x_pad, wbs, bnp)

    # Unpack: (N, H, W*C) -> NHWC -> NCHW.
    return jnp.transpose(out_pk.reshape(N, H, W, C), (0, 3, 1, 2))


def resbridge_reference(x_nchw, params):
    """Pure-JAX NCHW reference (matches PyTorch forward semantics)."""
    dn = lax.conv_dimension_numbers(x_nchw.shape, params["w1"].shape,
                                    ("NCHW", "OIHW", "NCHW"))

    def conv(x, w):
        return lax.conv_general_dilated(x, w, (1, 1), ((1, 1), (1, 1)),
                                        dimension_numbers=dn)

    def bn(y, g, b):
        mean = jnp.mean(y, axis=(0, 2, 3), keepdims=True)
        var = jnp.mean(jnp.square(y - mean), axis=(0, 2, 3), keepdims=True)
        return ((y - mean) / jnp.sqrt(var + BN_EPS)) * g.reshape(1, -1, 1, 1) \
               + b.reshape(1, -1, 1, 1)

    y = bn(conv(x_nchw, params["w1"]), params["g1"], params["b1"])
    a = jnp.maximum(y, 0.0)
    z = bn(conv(a, params["w2"]), params["g2"], params["b2"])
    return x_nchw + z


if __name__ == "__main__":
    N, C, H, W = 2, 8, 16, 16   # W*C = 128 -> exactly one lane tile

    key = jax.random.PRNGKey(0)
    k_w1, k_w2, k_g1, k_b1, k_g2, k_b2, k_x = jax.random.split(key, 7)

    bound = 1.0 / (C * 9) ** 0.5  # kaiming-uniform-ish deterministic init
    params = {
        "w1": jax.random.uniform(k_w1, (C, C, 3, 3), jnp.float32, -bound, bound),
        "w2": jax.random.uniform(k_w2, (C, C, 3, 3), jnp.float32, -bound, bound),
        "g1": jax.random.uniform(k_g1, (C,), jnp.float32, 0.5, 1.5),
        "b1": jax.random.uniform(k_b1, (C,), jnp.float32, -0.1, 0.1),
        "g2": jax.random.uniform(k_g2, (C,), jnp.float32, 0.5, 1.5),
        "b2": jax.random.uniform(k_b2, (C,), jnp.float32, -0.1, 0.1),
    }
    x = jax.random.normal(k_x, (N, C, H, W), jnp.float32)

    out = jax.block_until_ready(resbridge_forward(x, params))
    ref = jax.block_until_ready(resbridge_reference(x, params))

    assert out.shape == x.shape and out.dtype == jnp.float32
    err = float(jnp.max(jnp.abs(out - ref)))
    if err > 1e-4:
        raise AssertionError(f"mismatch vs reference: max abs err = {err}")

    print("KERNEL_OK")
</pallas_src>

<mosaic_0001>
module attributes {stable_mosaic.version = 11 : i64} {
  func.func @kernel(%arg0: memref<2x25x128xf32, #tpu.memory_space<vmem>>, %arg1: memref<6x128x128xf32, #tpu.memory_space<vmem>>, %arg2: memref<4x128xf32, #tpu.memory_space<vmem>>, %arg3: memref<2x16x128xf32, #tpu.memory_space<vmem>>, %arg4: memref<2x25x128xf32, #tpu.memory_space<vmem>>) attributes {dimension_semantics = [], scalar_prefetch = 0 : i64, scratch_operands = 1 : i64, tpu.core_type = #tpu.core_type<tc>} {
    %c0 = arith.constant 0 : index
    %c7 = arith.constant 7 : index
    %c0_0 = arith.constant 0 : index
    %0 = vector.load %arg0[%c0, %c7, %c0_0] : memref<2x25x128xf32, #tpu.memory_space<vmem>>, vector<2x16x128xf32>
    %1 = vector.shape_cast %0 : vector<2x16x128xf32> to vector<32x128xf32>
    %c0_1 = arith.constant 0 : index
    %c8 = arith.constant 8 : index
    %c0_2 = arith.constant 0 : index
    %2 = vector.load %arg0[%c0_1, %c8, %c0_2] : memref<2x25x128xf32, #tpu.memory_space<vmem>>, vector<2x16x128xf32>
    %3 = vector.shape_cast %2 : vector<2x16x128xf32> to vector<32x128xf32>
    %c0_3 = arith.constant 0 : index
    %c9 = arith.constant 9 : index
    %c0_4 = arith.constant 0 : index
    %4 = vector.load %arg0[%c0_3, %c9, %c0_4] : memref<2x25x128xf32, #tpu.memory_space<vmem>>, vector<2x16x128xf32>
    %5 = vector.shape_cast %4 : vector<2x16x128xf32> to vector<32x128xf32>
    %c0_5 = arith.constant 0 : index
    %c0_6 = arith.constant 0 : index
    %c0_7 = arith.constant 0 : index
    %6 = vector.load %arg1[%c0_5, %c0_6, %c0_7] : memref<6x128x128xf32, #tpu.memory_space<vmem>>, vector<1x128x128xf32>
    %7 = vector.shape_cast %6 : vector<1x128x128xf32> to vector<128x128xf32>
    %cst = arith.constant dense<0.000000e+00> : vector<32x128xf32>
    %8 = tpu.matmul %1, %7, %cst {dimension_numbers = #tpu.dot_dimension_numbers<[1], [0], [0], [1], [0, 0, 1, 1], [], []>} : vector<32x128xf32>, vector<128x128xf32>, vector<32x128xf32> -> vector<32x128xf32>
    %c1 = arith.constant 1 : index
    %c0_8 = arith.constant 0 : index
    %c0_9 = arith.constant 0 : index
    %9 = vector.load %arg1[%c1, %c0_8, %c0_9] : memref<6x128x128xf32, #tpu.memory_space<vmem>>, vector<1x128x128xf32>
    %10 = vector.shape_cast %9 : vector<1x128x128xf32> to vector<128x128xf32>
    %cst_10 = arith.constant dense<0.000000e+00> : vector<32x128xf32>
    %11 = tpu.matmul %3, %10, %cst_10 {dimension_numbers = #tpu.dot_dimension_numbers<[1], [0], [0], [1], [0, 0, 1, 1], [], []>} : vector<32x128xf32>, vector<128x128xf32>, vector<32x128xf32> -> vector<32x128xf32>
    %12 = arith.addf %8, %11 : vector<32x128xf32>
    %c2 = arith.constant 2 : index
    %c0_11 = arith.constant 0 : index
    %c0_12 = arith.constant 0 : index
    %13 = vector.load %arg1[%c2, %c0_11, %c0_12] : memref<6x128x128xf32, #tpu.memory_space<vmem>>, vector<1x128x128xf32>
    %14 = vector.shape_cast %13 : vector<1x128x128xf32> to vector<128x128xf32>
    %cst_13 = arith.constant dense<0.000000e+00> : vector<32x128xf32>
    %15 = tpu.matmul %5, %14, %cst_13 {dimension_numbers = #tpu.dot_dimension_numbers<[1], [0], [0], [1], [0, 0, 1, 1], [], []>} : vector<32x128xf32>, vector<128x128xf32>, vector<32x128xf32> -> vector<32x128xf32>
    %16 = arith.addf %12, %15 : vector<32x128xf32>
    %c0_14 = arith.constant 0 : index
    %c0_15 = arith.constant 0 : index
    %17 = vector.load %arg2[%c0_14, %c0_15] : memref<4x128xf32, #tpu.memory_space<vmem>>, vector<1x128xf32>
    %c1_16 = arith.constant 1 : index
    %c0_17 = arith.constant 0 : index
    %18 = vector.load %arg2[%c1_16, %c0_17] : memref<4x128xf32, #tpu.memory_space<vmem>>, vector<1x128xf32>
    %cst_18 = arith.constant dense<0.000000e+00> : vector<128xf32>
    %19 = vector.multi_reduction <add>, %16, %cst_18 [0] : vector<32x128xf32> to vector<128xf32>
    %20 = vector.shape_cast %19 : vector<128xf32> to vector<1x128xf32>
    %21 = arith.mulf %16, %16 : vector<32x128xf32>
    %cst_19 = arith.constant dense<0.000000e+00> : vector<128xf32>
    %22 = vector.multi_reduction <add>, %21, %cst_19 [0] : vector<32x128xf32> to vector<128xf32>
    %23 = vector.shape_cast %22 : vector<128xf32> to vector<1x128xf32>
    %24 = tpu.concatenate %20, %23 in 0 : vector<1x128xf32>, vector<1x128xf32> -> vector<2x128xf32>
    %c8_i32 = arith.constant 8 : i32
    %25 = tpu.dynamic_rotate %24 by %c8_i32 dim 1 : vector<2x128xf32>, i32 -> vector<2x128xf32>
    %26 = arith.addf %24, %25 : vector<2x128xf32>
    %c16_i32 = arith.constant 16 : i32
    %27 = tpu.dynamic_rotate %26 by %c16_i32 dim 1 : vector<2x128xf32>, i32 -> vector<2x128xf32>
    %28 = arith.addf %26, %27 : vector<2x128xf32>
    %c32_i32 = arith.constant 32 : i32
    %29 = tpu.dynamic_rotate %28 by %c32_i32 dim 1 : vector<2x128xf32>, i32 -> vector<2x128xf32>
    %30 = arith.addf %28, %29 : vector<2x128xf32>
    %c64_i32 = arith.constant 64 : i32
    %31 = tpu.dynamic_rotate %30 by %c64_i32 dim 1 : vector<2x128xf32>, i32 -> vector<2x128xf32>
    %32 = arith.addf %30, %31 : vector<2x128xf32>
    %33 = vector.extract_strided_slice %32 {offsets = [0, 0], sizes = [1, 128], strides = [1, 1]} : vector<2x128xf32> to vector<1x128xf32>
    %cst_20 = arith.constant 0.001953125 : f32
    %34 = vector.broadcast %cst_20 : f32 to vector<1x128xf32>
    %35 = arith.mulf %33, %34 : vector<1x128xf32>
    %36 = vector.extract_strided_slice %32 {offsets = [1, 0], sizes = [1, 128], strides = [1, 1]} : vector<2x128xf32> to vector<1x128xf32>
    %cst_21 = arith.constant 0.001953125 : f32
    %37 = vector.broadcast %cst_21 : f32 to vector<1x128xf32>
    %38 = arith.mulf %36, %37 : vector<1x128xf32>
    %39 = arith.mulf %35, %35 : vector<1x128xf32>
    %40 = arith.subf %38, %39 : vector<1x128xf32>
    %cst_22 = arith.constant 9.99999974E-6 : f32
    %41 = vector.broadcast %cst_22 : f32 to vector<1x128xf32>
    %42 = arith.addf %40, %41 : vector<1x128xf32>
    %43 = math.rsqrt %42 : vector<1x128xf32>
    %44 = arith.mulf %17, %43 : vector<1x128xf32>
    %45 = arith.mulf %35, %44 : vector<1x128xf32>
    %46 = arith.subf %18, %45 : vector<1x128xf32>
    %47 = vector.broadcast %44 : vector<1x128xf32> to vector<32x128xf32>
    %48 = arith.mulf %16, %47 : vector<32x128xf32>
    %49 = vector.broadcast %46 : vector<1x128xf32> to vector<32x128xf32>
    %50 = arith.addf %48, %49 : vector<32x128xf32>
    %cst_23 = arith.constant 0.000000e+00 : f32
    %51 = vector.broadcast %cst_23 : f32 to vector<32x128xf32>
    %52 = arith.maximumf %50, %51 : vector<32x128xf32>
    %cst_24 = arith.constant 0.000000e+00 : f32
    %53 = vector.broadcast %cst_24 : f32 to vector<2x1x128xf32>
    %c0_25 = arith.constant 0 : index
    %c7_26 = arith.constant 7 : index
    %c0_27 = arith.constant 0 : index
    %54 = vector.load %arg4[%c0_25, %c7_26, %c0_27] : memref<2x25x128xf32, #tpu.memory_space<vmem>>, vector<2x1x128xf32>
    tpu.vector_store %arg4[%c0_25, %c7_26, %c0_27], %53 {strides = array<i32>} : memref<2x25x128xf32, #tpu.memory_space<vmem>>, vector<2x1x128xf32>,
    %c0_28 = arith.constant 0 : index
    %c24 = arith.constant 24 : index
    %c0_29 = arith.constant 0 : index
    %55 = vector.load %arg4[%c0_28, %c24, %c0_29] : memref<2x25x128xf32, #tpu.memory_space<vmem>>, vector<2x1x128xf32>
    tpu.vector_store %arg4[%c0_28, %c24, %c0_29], %53 {strides = array<i32>} : memref<2x25x128xf32, #tpu.memory_space<vmem>>, vector<2x1x128xf32>,
    %56 = vector.shape_cast %52 : vector<32x128xf32> to vector<2x16x128xf32>
    %c0_30 = arith.constant 0 : index
    %c8_31 = arith.constant 8 : index
    %c0_32 = arith.constant 0 : index
    %57 = vector.load %arg4[%c0_30, %c8_31, %c0_32] : memref<2x25x128xf32, #tpu.memory_space<vmem>>, vector<2x16x128xf32>
    tpu.vector_store %arg4[%c0_30, %c8_31, %c0_32], %56 {strides = array<i32>} : memref<2x25x128xf32, #tpu.memory_space<vmem>>, vector<2x16x128xf32>,
    %c0_33 = arith.constant 0 : index
    %c7_34 = arith.constant 7 : index
    %c0_35 = arith.constant 0 : index
    %58 = vector.load %arg4[%c0_33, %c7_34, %c0_35] : memref<2x25x128xf32, #tpu.memory_space<vmem>>, vector<2x16x128xf32>
    %59 = vector.shape_cast %58 : vector<2x16x128xf32> to vector<32x128xf32>
    %c0_36 = arith.constant 0 : index
    %c8_37 = arith.constant 8 : index
    %c0_38 = arith.constant 0 : index
    %60 = vector.load %arg4[%c0_36, %c8_37, %c0_38] : memref<2x25x128xf32, #tpu.memory_space<vmem>>, vector<2x16x128xf32>
    %61 = vector.shape_cast %60 : vector<2x16x128xf32> to vector<32x128xf32>
    %c0_39 = arith.constant 0 : index
    %c9_40 = arith.constant 9 : index
    %c0_41 = arith.constant 0 : index
    %62 = vector.load %arg4[%c0_39, %c9_40, %c0_41] : memref<2x25x128xf32, #tpu.memory_space<vmem>>, vector<2x16x128xf32>
    %63 = vector.shape_cast %62 : vector<2x16x128xf32> to vector<32x128xf32>
    %c3 = arith.constant 3 : index
    %c0_42 = arith.constant 0 : index
    %c0_43 = arith.constant 0 : index
    %64 = vector.load %arg1[%c3, %c0_42, %c0_43] : memref<6x128x128xf32, #tpu.memory_space<vmem>>, vector<1x128x128xf32>
    %65 = vector.shape_cast %64 : vector<1x128x128xf32> to vector<128x128xf32>
    %cst_44 = arith.constant dense<0.000000e+00> : vector<32x128xf32>
    %66 = tpu.matmul %59, %65, %cst_44 {dimension_numbers = #tpu.dot_dimension_numbers<[1], [0], [0], [1], [0, 0, 1, 1], [], []>} : vector<32x128xf32>, vector<128x128xf32>, vector<32x128xf32> -> vector<32x128xf32>
    %c4 = arith.constant 4 : index
    %c0_45 = arith.constant 0 : index
    %c0_46 = arith.constant 0 : index
    %67 = vector.load %arg1[%c4, %c0_45, %c0_46] : memref<6x128x128xf32, #tpu.memory_space<vmem>>, vector<1x128x128xf32>
    %68 = vector.shape_cast %67 : vector<1x128x128xf32> to vector<128x128xf32>
    %cst_47 = arith.constant dense<0.000000e+00> : vector<32x128xf32>
    %69 = tpu.matmul %61, %68, %cst_47 {dimension_numbers = #tpu.dot_dimension_numbers<[1], [0], [0], [1], [0, 0, 1, 1], [], []>} : vector<32x128xf32>, vector<128x128xf32>, vector<32x128xf32> -> vector<32x128xf32>
    %70 = arith.addf %66, %69 : vector<32x128xf32>
    %c5 = arith.constant 5 : index
    %c0_48 = arith.constant 0 : index
    %c0_49 = arith.constant 0 : index
    %71 = vector.load %arg1[%c5, %c0_48, %c0_49] : memref<6x128x128xf32, #tpu.memory_space<vmem>>, vector<1x128x128xf32>
    %72 = vector.shape_cast %71 : vector<1x128x128xf32> to vector<128x128xf32>
    %cst_50 = arith.constant dense<0.000000e+00> : vector<32x128xf32>
    %73 = tpu.matmul %63, %72, %cst_50 {dimension_numbers = #tpu.dot_dimension_numbers<[1], [0], [0], [1], [0, 0, 1, 1], [], []>} : vector<32x128xf32>, vector<128x128xf32>, vector<32x128xf32> -> vector<32x128xf32>
    %74 = arith.addf %70, %73 : vector<32x128xf32>
    %c2_51 = arith.constant 2 : index
    %c0_52 = arith.constant 0 : index
    %75 = vector.load %arg2[%c2_51, %c0_52] : memref<4x128xf32, #tpu.memory_space<vmem>>, vector<1x128xf32>
    %c3_53 = arith.constant 3 : index
    %c0_54 = arith.constant 0 : index
    %76 = vector.load %arg2[%c3_53, %c0_54] : memref<4x128xf32, #tpu.memory_space<vmem>>, vector<1x128xf32>
    %cst_55 = arith.constant dense<0.000000e+00> : vector<128xf32>
    %77 = vector.multi_reduction <add>, %74, %cst_55 [0] : vector<32x128xf32> to vector<128xf32>
    %78 = vector.shape_cast %77 : vector<128xf32> to vector<1x128xf32>
    %79 = arith.mulf %74, %74 : vector<32x128xf32>
    %cst_56 = arith.constant dense<0.000000e+00> : vector<128xf32>
    %80 = vector.multi_reduction <add>, %79, %cst_56 [0] : vector<32x128xf32> to vector<128xf32>
    %81 = vector.shape_cast %80 : vector<128xf32> to vector<1x128xf32>
    %82 = tpu.concatenate %78, %81 in 0 : vector<1x128xf32>, vector<1x128xf32> -> vector<2x128xf32>
    %c8_i32_57 = arith.constant 8 : i32
    %83 = tpu.dynamic_rotate %82 by %c8_i32_57 dim 1 : vector<2x128xf32>, i32 -> vector<2x128xf32>
    %84 = arith.addf %82, %83 : vector<2x128xf32>
    %c16_i32_58 = arith.constant 16 : i32
    %85 = tpu.dynamic_rotate %84 by %c16_i32_58 dim 1 : vector<2x128xf32>, i32 -> vector<2x128xf32>
    %86 = arith.addf %84, %85 : vector<2x128xf32>
    %c32_i32_59 = arith.constant 32 : i32
    %87 = tpu.dynamic_rotate %86 by %c32_i32_59 dim 1 : vector<2x128xf32>, i32 -> vector<2x128xf32>
    %88 = arith.addf %86, %87 : vector<2x128xf32>
    %c64_i32_60 = arith.constant 64 : i32
    %89 = tpu.dynamic_rotate %88 by %c64_i32_60 dim 1 : vector<2x128xf32>, i32 -> vector<2x128xf32>
    %90 = arith.addf %88, %89 : vector<2x128xf32>
    %91 = vector.extract_strided_slice %90 {offsets = [0, 0], sizes = [1, 128], strides = [1, 1]} : vector<2x128xf32> to vector<1x128xf32>
    %cst_61 = arith.constant 0.001953125 : f32
    %92 = vector.broadcast %cst_61 : f32 to vector<1x128xf32>
    %93 = arith.mulf %91, %92 : vector<1x128xf32>
    %94 = vector.extract_strided_slice %90 {offsets = [1, 0], sizes = [1, 128], strides = [1, 1]} : vector<2x128xf32> to vector<1x128xf32>
    %cst_62 = arith.constant 0.001953125 : f32
    %95 = vector.broadcast %cst_62 : f32 to vector<1x128xf32>
    %96 = arith.mulf %94, %95 : vector<1x128xf32>
    %97 = arith.mulf %93, %93 : vector<1x128xf32>
    %98 = arith.subf %96, %97 : vector<1x128xf32>
    %cst_63 = arith.constant 9.99999974E-6 : f32
    %99 = vector.broadcast %cst_63 : f32 to vector<1x128xf32>
    %100 = arith.addf %98, %99 : vector<1x128xf32>
    %101 = math.rsqrt %100 : vector<1x128xf32>
    %102 = arith.mulf %75, %101 : vector<1x128xf32>
    %103 = arith.mulf %93, %102 : vector<1x128xf32>
    %104 = arith.subf %76, %103 : vector<1x128xf32>
    %105 = vector.broadcast %102 : vector<1x128xf32> to vector<32x128xf32>
    %106 = arith.mulf %74, %105 : vector<32x128xf32>
    %107 = vector.broadcast %104 : vector<1x128xf32> to vector<32x128xf32>
    %108 = arith.addf %106, %107 : vector<32x128xf32>
    %109 = arith.addf %3, %108 : vector<32x128xf32>
    %110 = vector.shape_cast %109 : vector<32x128xf32> to vector<2x16x128xf32>
    %c0_64 = arith.constant 0 : index
    %c0_65 = arith.constant 0 : index
    %c0_66 = arith.constant 0 : index
    %111 = vector.load %arg3[%c0_64, %c0_65, %c0_66] : memref<2x16x128xf32, #tpu.memory_space<vmem>>, vector<2x16x128xf32>
    tpu.vector_store %arg3[%c0_64, %c0_65, %c0_66], %110 {strides = array<i32>} : memref<2x16x128xf32, #tpu.memory_space<vmem>>, vector<2x16x128xf32>,
    return
  }
}

</mosaic_0001>

<llo_original>
// kernel: tpu_custom_call.1
$region0: #{tpu_custom_call.1}
  #allocation0 [shape = 'u32[]', space=smem, size = 0x4, offset = 0x4, fixed_abs, tag = 'smem constant byte address 0x4 - core index']
  #allocation1 [shape = 'u32[144,128]{1,0:T(1,128)}', space=vmem, size = 0x12000, scoped, tag = 'internal scratch']
  #allocation2 [shape = 'f32[2,25,128]{2,1,0:T(8,128)}', space=vmem, size = 0x8000, scoped, tag = 'scratch operand']
  %s0 = inlined_call_operand.vmem [shape: f32[2,25,128], index: 0, kind: input, shape index: {}]
  %s1 = inlined_call_operand.hbm [shape: f32[6,128,128], index: 1, kind: input, shape index: {}]
  %s2 = inlined_call_operand.vmem [shape: f32[4,128], index: 2, kind: input, shape index: {}]
  %s3 = inlined_call_operand.hbm [shape: f32[2,16,128], index: 3, kind: output, shape index: {}]
  %s4 = sld [smem:[#allocation0]]
  $region26: #{tpu_custom_call.1} parent=0
    _
  %s6 = ssub.s32 1, %s4
  %s7 = scalar_select 0, %s6, %s4
  $region1: #{tpu_custom_call.1} parent=0
    #allocation3 [shape = 'u8[393216]{0}', space=vmem, size = 0x60000, scoped, tag = 'input window, operand 1, single buffered']
    #allocation4 [shape = 's32[1]{0}', space=sflag, size = 0x4, scoped, tag = 'scoped memory for tpu_custom_call.1']
    #allocation5 [shape = 's32[1]{0}', space=sflag, size = 0x4, scoped, tag = 'scoped memory for tpu_custom_call.1']
    #allocation6 [shape = 'u8[16384]{0}', space=vmem, size = 0x4000, scoped, tag = 'output window, operand 0, single buffered']
    %8 = vsyncpa [#allocation4], 0
    %9 = vsyncpa [#allocation5], 0
    // Predicated region
    $region2: #{tpu_custom_call.1} parent=1 // pred_check
      _
    $region3: #{tpu_custom_call.1} parent=1 // pred_check_branch
      %11 = sbr.rel (0) target = $region5
    $region4: #{tpu_custom_call.1} parent=1 // pred_region
      _
    $region5: #{tpu_custom_call.1} parent=1 // pred_fallthru
      _
    // Predicated region
    $region6: #{tpu_custom_call.1} parent=1 // pred_check
      _
    $region7: #{tpu_custom_call.1} parent=1 // pred_check_branch
      %13 = sbr.rel (0) target = $region9
    $region8: #{tpu_custom_call.1} parent=1 // pred_region
      %s15 = ssub.s32 12288, 12288
      %16 = vsyncadd [#allocation4], %s15
      %s17 = sshll.u32 [#allocation3], 4
      %s18 = int_to_ptr.vmem [resolvable:$true] %s17
      %23 = dma.hbm_to_vmem [thread:$0]  %s1, 12288, %s18, [#allocation4], 128, 128, 8
    $region9: #{tpu_custom_call.1} parent=1 // pred_fallthru
      _
    // Predicated region
    $region10: #{tpu_custom_call.1} parent=1 // pred_check
      _
    $region11: #{tpu_custom_call.1} parent=1 // pred_check_branch
      %25 = sbr.rel (0) target = $region13
    $region12: #{tpu_custom_call.1} parent=1 // pred_region
      _
    $region13: #{tpu_custom_call.1} parent=1 // pred_fallthru
      _
    // Predicated region
    $region14: #{tpu_custom_call.1} parent=1 // pred_check
      _
    $region15: #{tpu_custom_call.1} parent=1 // pred_check_branch
      %27 = sbr.rel (0) target = $region17
    $region16: #{tpu_custom_call.1} parent=1 // pred_region
      %28 = dma.done [#allocation4], 12288
    $region17: #{tpu_custom_call.1} parent=1 // pred_fallthru
      _
    %v29 = vld [vmem:[%s0 + $0x7] sm:$0xff]
    %v30 = vld [vmem:[%s0 + $0xf] sm:$0xff]
    %v31 = vld [vmem:[%s0 + $0x27] sm:$0xff]
    %v32 = vld [vmem:[%s0 + $0x2f] sm:$0xff]
    %v33 = vld [vmem:[%s0 + $0x8] sm:$0xff]
    %v34 = vld [vmem:[%s0 + $0x10] sm:$0xff]
    %v35 = vld [vmem:[%s0 + $0x28] sm:$0xff]
    %v36 = vld [vmem:[%s0 + $0x30] sm:$0xff]
    %v37 = vld [vmem:[%s0 + $0x9] sm:$0xff]
    %v38 = vld [vmem:[%s0 + $0x11] sm:$0xff]
    %v39 = vld [vmem:[%s0 + $0x29] sm:$0xff]
    %v40 = vld [vmem:[%s0 + $0x31] sm:$0xff]
    %v41 = vld [vmem:[#allocation3] sm:$0xff]
    %v42 = vld [vmem:[#allocation3 + $0x8] sm:$0xff]
    %v43 = vld [vmem:[#allocation3 + $0x10] sm:$0xff]
    %v44 = vld [vmem:[#allocation3 + $0x18] sm:$0xff]
    %v45 = vld [vmem:[#allocation3 + $0x20] sm:$0xff]
    %v46 = vld [vmem:[#allocation3 + $0x28] sm:$0xff]
    %v47 = vld [vmem:[#allocation3 + $0x30] sm:$0xff]
    %v48 = vld [vmem:[#allocation3 + $0x38] sm:$0xff]
    %v49 = vld [vmem:[#allocation3 + $0x40] sm:$0xff]
    %v50 = vld [vmem:[#allocation3 + $0x48] sm:$0xff]
    %v51 = vld [vmem:[#allocation3 + $0x50] sm:$0xff]
    %v52 = vld [vmem:[#allocation3 + $0x58] sm:$0xff]
    %v53 = vld [vmem:[#allocation3 + $0x60] sm:$0xff]
    %v54 = vld [vmem:[#allocation3 + $0x68] sm:$0xff]
    %v55 = vld [vmem:[#allocation3 + $0x70] sm:$0xff]
    %v56 = vld [vmem:[#allocation3 + $0x78] sm:$0xff]
    %s57 = scalar_lea.vmem [#allocation3], 128
    %v58 = vld [vmem:[%s57] sm:$0xff]
    %v59 = vld [vmem:[%s57 + $0x8] sm:$0xff]
    %v60 = vld [vmem:[%s57 + $0x10] sm:$0xff]
    %v61 = vld [vmem:[%s57 + $0x18] sm:$0xff]
    %v62 = vld [vmem:[%s57 + $0x20] sm:$0xff]
    %v63 = vld [vmem:[%s57 + $0x28] sm:$0xff]
    %v64 = vld [vmem:[%s57 + $0x30] sm:$0xff]
    %v65 = vld [vmem:[%s57 + $0x38] sm:$0xff]
    %v66 = vld [vmem:[%s57 + $0x40] sm:$0xff]
    %v67 = vld [vmem:[%s57 + $0x48] sm:$0xff]
    %v68 = vld [vmem:[%s57 + $0x50] sm:$0xff]
    %v69 = vld [vmem:[%s57 + $0x58] sm:$0xff]
    %v70 = vld [vmem:[%s57 + $0x60] sm:$0xff]
    %v71 = vld [vmem:[%s57 + $0x68] sm:$0xff]
    %v72 = vld [vmem:[%s57 + $0x70] sm:$0xff]
    %v73 = vld [vmem:[%s57 + $0x78] sm:$0xff]
    %74 = vmatprep.subr.mxu0 0.0
    %75 = vmatpush1.msra.mxu0 %v73
    %76 = vmatprep.subr.mxu0 0.0
    %77 = vmatpush1.msra.mxu0 %v72
    %78 = vmatprep.subr.mxu0 0.0
    %79 = vmatpush1.msra.mxu0 %v71
    %80 = vmatprep.subr.mxu0 0.0
    %81 = vmatpush1.msra.mxu0 %v70
    %82 = vmatprep.subr.mxu0 0.0
    %83 = vmatpush1.msra.mxu0 %v69
    %84 = vmatprep.subr.mxu0 0.0
    %85 = vmatpush1.msra.mxu0 %v68
    %86 = vmatprep.subr.mxu0 0.0
    %87 = vmatpush1.msra.mxu0 %v67
    %88 = vmatprep.subr.mxu0 0.0
    %89 = vmatpush1.msra.mxu0 %v66
    %90 = vmatprep.subr.mxu0 0.0
    %91 = vmatpush1.msra.mxu0 %v65
    %92 = vmatprep.subr.mxu0 0.0
    %93 = vmatpush1.msra.mxu0 %v64
    %94 = vmatprep.subr.mxu0 0.0
    %95 = vmatpush1.msra.mxu0 %v63
    %96 = vmatprep.subr.mxu0 0.0
    %97 = vmatpush1.msra.mxu0 %v62
    %98 = vmatprep.subr.mxu0 0.0
    %99 = vmatpush1.msra.mxu0 %v61
    %100 = vmatprep.subr.mxu0 0.0
    %101 = vmatpush1.msra.mxu0 %v60
    %102 = vmatprep.subr.mxu0 0.0
    %103 = vmatpush1.msra.mxu0 %v59
    %104 = vmatprep.subr.mxu0 0.0
    %105 = vmatpush1.msra.mxu0 %v58
    %106 = vmatprep.subr.mxu0 0.0
    %107 = vmatpush2.msra.mxu0 0.0
    %108 = vmatprep.subr.mxu0 0.0
    %109 = vmatpush2.msra.mxu0 0.0
    %110 = vmatprep.subr.mxu0 0.0
    %111 = vmatpush2.msra.mxu0 0.0
    %112 = vmatprep.subr.mxu0 0.0
    %113 = vmatpush2.msra.mxu0 0.0
    %114 = vmatprep.subr.mxu0 0.0
    %115 = vmatpush2.msra.mxu0 0.0
    %116 = vmatprep.subr.mxu0 0.0
    %117 = vmatpush2.msra.mxu0 0.0
    %118 = vmatprep.subr.mxu0 0.0
    %119 = vmatpush2.msra.mxu0 0.0
    %120 = vmatprep.subr.mxu0 0.0
    %121 = vmatpush2.msra.mxu0 0.0
    %122 = vmatprep.subr.mxu0 0.0
    %123 = vmatpush2.msra.mxu0 0.0
    %124 = vmatprep.subr.mxu0 0.0
    %125 = vmatpush2.msra.mxu0 0.0
    %126 = vmatprep.subr.mxu0 0.0
    %127 = vmatpush2.msra.mxu0 0.0
    %128 = vmatprep.subr.mxu0 0.0
    %129 = vmatpush2.msra.mxu0 0.0
    %130 = vmatprep.subr.mxu0 0.0
    %131 = vmatpush2.msra.mxu0 0.0
    %132 = vmatprep.subr.mxu0 0.0
    %133 = vmatpush2.msra.mxu0 0.0
    %134 = vmatprep.subr.mxu0 0.0
    %135 = vmatpush2.msra.mxu0 0.0
    %136 = vmatprep.subr.mxu0 0.0
    %137 = vmatpush2.msra.mxu0 0.0
    %138 = vmatprep.mubr.f32.mxu0 0.0
    %139 = vmatmul.mubr.f32.gmra.mxu0 %v33
    %v140 = vpop.f32.mrf.mxu0
    %v141 = vadd.f32 0.0, %v140
    %v142 = vpop.f32.mrf.mxu0
    %143 = vmatprep.mubr.f32.mxu0 0.0
    %144 = vmatmul.mubr.f32.gmra.mxu0 %v34
    %v145 = vpop.f32.mrf.mxu0
    %v146 = vadd.f32 0.0, %v145
    %v147 = vpop.f32.mrf.mxu0
    %148 = vmatprep.mubr.f32.mxu0 0.0
    %149 = vmatmul.mubr.f32.gmra.mxu0 %v35
    %v150 = vpop.f32.mrf.mxu0
    %v151 = vadd.f32 0.0, %v150
    %v152 = vpop.f32.mrf.mxu0
    %153 = vmatprep.mubr.f32.mxu0 0.0
    %154 = vmatmul.mubr.f32.gmra.mxu0 %v36
    %v155 = vpop.f32.mrf.mxu0
    %v156 = vadd.f32 0.0, %v155
    %v157 = vpop.f32.mrf.mxu0
    %158 = vdwg.mxu0
    %159 = vmatprep.subr.mxu0 0.0
    %160 = vmatpush1.msra.mxu0 %v56
    %161 = vmatprep.subr.mxu0 0.0
    %162 = vmatpush1.msra.mxu0 %v55
    %163 = vmatprep.subr.mxu0 0.0
    %164 = vmatpush1.msra.mxu0 %v54
    %165 = vmatprep.subr.mxu0 0.0
    %166 = vmatpush1.msra.mxu0 %v53
    %167 = vmatprep.subr.mxu0 0.0
    %168 = vmatpush1.msra.mxu0 %v52
    %169 = vmatprep.subr.mxu0 0.0
    %170 = vmatpush1.msra.mxu0 %v51
    %171 = vmatprep.subr.mxu0 0.0
    %172 = vmatpush1.msra.mxu0 %v50
    %173 = vmatprep.subr.mxu0 0.0
    %174 = vmatpush1.msra.mxu0 %v49
    %175 = vmatprep.subr.mxu0 0.0
    %176 = vmatpush1.msra.mxu0 %v48
    %177 = vmatprep.subr.mxu0 0.0
    %178 = vmatpush1.msra.mxu0 %v47
    %179 = vmatprep.subr.mxu0 0.0
    %180 = vmatpush1.msra.mxu0 %v46
    %181 = vmatprep.subr.mxu0 0.0
    %182 = vmatpush1.msra.mxu0 %v45
    %183 = vmatprep.subr.mxu0 0.0
    %184 = vmatpush1.msra.mxu0 %v44
    %185 = vmatprep.subr.mxu0 0.0
    %186 = vmatpush1.msra.mxu0 %v43
    %187 = vmatprep.subr.mxu0 0.0
    %188 = vmatpush1.msra.mxu0 %v42
    %189 = vmatprep.subr.mxu0 0.0
    %190 = vmatpush1.msra.mxu0 %v41
    %191 = vmatprep.subr.mxu0 0.0
    %192 = vmatpush2.msra.mxu0 0.0
    %193 = vmatprep.subr.mxu0 0.0
    %194 = vmatpush2.msra.mxu0 0.0
    %195 = vmatprep.subr.mxu0 0.0
    %196 = vmatpush2.msra.mxu0 0.0
    %197 = vmatprep.subr.mxu0 0.0
    %198 = vmatpush2.msra.mxu0 0.0
    %199 = vmatprep.subr.mxu0 0.0
    %200 = vmatpush2.msra.mxu0 0.0
    %201 = vmatprep.subr.mxu0 0.0
    %202 = vmatpush2.msra.mxu0 0.0
    %203 = vmatprep.subr.mxu0 0.0
    %204 = vmatpush2.msra.mxu0 0.0
    %205 = vmatprep.subr.mxu0 0.0
    %206 = vmatpush2.msra.mxu0 0.0
    %207 = vmatprep.subr.mxu0 0.0
    %208 = vmatpush2.msra.mxu0 0.0
    %209 = vmatprep.subr.mxu0 0.0
    %210 = vmatpush2.msra.mxu0 0.0
    %211 = vmatprep.subr.mxu0 0.0
    %212 = vmatpush2.msra.mxu0 0.0
    %213 = vmatprep.subr.mxu0 0.0
    %214 = vmatpush2.msra.mxu0 0.0
    %215 = vmatprep.subr.mxu0 0.0
    %216 = vmatpush2.msra.mxu0 0.0
    %217 = vmatprep.subr.mxu0 0.0
    %218 = vmatpush2.msra.mxu0 0.0
    %219 = vmatprep.subr.mxu0 0.0
    %220 = vmatpush2.msra.mxu0 0.0
    %221 = vmatprep.subr.mxu0 0.0
    %222 = vmatpush2.msra.mxu0 0.0
    %223 = vmatprep.mubr.f32.mxu0 0.0
    %224 = vmatmul.mubr.f32.gmra.mxu0 %v29
    %v225 = vpop.f32.mrf.mxu0
    %v226 = vadd.f32 %v141, %v225
    %v227 = vpop.f32.mrf.mxu0
    %228 = vmatprep.mubr.f32.mxu0 0.0
    %229 = vmatmul.mubr.f32.gmra.mxu0 %v30
    %v230 = vpop.f32.mrf.mxu0
    %v231 = vadd.f32 %v146, %v230
    %v232 = vpop.f32.mrf.mxu0
    %233 = vmatprep.mubr.f32.mxu0 0.0
    %234 = vmatmul.mubr.f32.gmra.mxu0 %v31
    %v235 = vpop.f32.mrf.mxu0
    %v236 = vadd.f32 %v151, %v235
    %v237 = vpop.f32.mrf.mxu0
    %238 = vmatprep.mubr.f32.mxu0 0.0
    %239 = vmatmul.mubr.f32.gmra.mxu0 %v32
    %v240 = vpop.f32.mrf.mxu0
    %v241 = vadd.f32 %v156, %v240
    %v242 = vpop.f32.mrf.mxu0
    %243 = vdwg.mxu0
    %s244 = scalar_lea.vmem [#allocation3], 256
    %v245 = vld [vmem:[%s244] sm:$0xff]
    %v246 = vld [vmem:[%s244 + $0x8] sm:$0xff]
    %v247 = vld [vmem:[%s244 + $0x10] sm:$0xff]
    %v248 = vld [vmem:[%s244 + $0x18] sm:$0xff]
    %v249 = vld [vmem:[%s244 + $0x20] sm:$0xff]
    %v250 = vld [vmem:[%s244 + $0x28] sm:$0xff]
    %v251 = vld [vmem:[%s244 + $0x30] sm:$0xff]
    %v252 = vld [vmem:[%s244 + $0x38] sm:$0xff]
    %v253 = vld [vmem:[%s244 + $0x40] sm:$0xff]
    %v254 = vld [vmem:[%s244 + $0x48] sm:$0xff]
    %v255 = vld [vmem:[%s244 + $0x50] sm:$0xff]
    %v256 = vld [vmem:[%s244 + $0x58] sm:$0xff]
    %v257 = vld [vmem:[%s244 + $0x60] sm:$0xff]
    %v258 = vld [vmem:[%s244 + $0x68] sm:$0xff]
    %v259 = vld [vmem:[%s244 + $0x70] sm:$0xff]
    %v260 = vld [vmem:[%s244 + $0x78] sm:$0xff]
    %261 = vmatprep.subr.mxu0 0.0
    %262 = vmatpush1.msra.mxu0 %v260
    %263 = vmatprep.subr.mxu0 0.0
    %264 = vmatpush1.msra.mxu0 %v259
    %265 = vmatprep.subr.mxu0 0.0
    %266 = vmatpush1.msra.mxu0 %v258
    %267 = vmatprep.subr.mxu0 0.0
    %268 = vmatpush1.msra.mxu0 %v257
    %269 = vmatprep.subr.mxu0 0.0
    %270 = vmatpush1.msra.mxu0 %v256
    %271 = vmatprep.subr.mxu0 0.0
    %272 = vmatpush1.msra.mxu0 %v255
    %273 = vmatprep.subr.mxu0 0.0
    %274 = vmatpush1.msra.mxu0 %v254
    %275 = vmatprep.subr.mxu0 0.0
    %276 = vmatpush1.msra.mxu0 %v253
    %277 = vmatprep.subr.mxu0 0.0
    %278 = vmatpush1.msra.mxu0 %v252
    %279 = vmatprep.subr.mxu0 0.0
    %280 = vmatpush1.msra.mxu0 %v251
    %281 = vmatprep.subr.mxu0 0.0
    %282 = vmatpush1.msra.mxu0 %v250
    %283 = vmatprep.subr.mxu0 0.0
    %284 = vmatpush1.msra.mxu0 %v249
    %285 = vmatprep.subr.mxu0 0.0
    %286 = vmatpush1.msra.mxu0 %v248
    %287 = vmatprep.subr.mxu0 0.0
    %288 = vmatpush1.msra.mxu0 %v247
    %289 = vmatprep.subr.mxu0 0.0
    %290 = vmatpush1.msra.mxu0 %v246
    %291 = vmatprep.subr.mxu0 0.0
    %292 = vmatpush1.msra.mxu0 %v245
    %293 = vmatprep.subr.mxu0 0.0
    %294 = vmatpush2.msra.mxu0 0.0
    %295 = vmatprep.subr.mxu0 0.0
    %296 = vmatpush2.msra.mxu0 0.0
    %297 = vmatprep.subr.mxu0 0.0
    %298 = vmatpush2.msra.mxu0 0.0
    %299 = vmatprep.subr.mxu0 0.0
    %300 = vmatpush2.msra.mxu0 0.0
    %301 = vmatprep.subr.mxu0 0.0
    %302 = vmatpush2.msra.mxu0 0.0
    %303 = vmatprep.subr.mxu0 0.0
    %304 = vmatpush2.msra.mxu0 0.0
    %305 = vmatprep.subr.mxu0 0.0
    %306 = vmatpush2.msra.mxu0 0.0
    %307 = vmatprep.subr.mxu0 0.0
    %308 = vmatpush2.msra.mxu0 0.0
    %309 = vmatprep.subr.mxu0 0.0
    %310 = vmatpush2.msra.mxu0 0.0
    %311 = vmatprep.subr.mxu0 0.0
    %312 = vmatpush2.msra.mxu0 0.0
    %313 = vmatprep.subr.mxu0 0.0
    %314 = vmatpush2.msra.mxu0 0.0
    %315 = vmatprep.subr.mxu0 0.0
    %316 = vmatpush2.msra.mxu0 0.0
    %317 = vmatprep.subr.mxu0 0.0
    %318 = vmatpush2.msra.mxu0 0.0
    %319 = vmatprep.subr.mxu0 0.0
    %320 = vmatpush2.msra.mxu0 0.0
    %321 = vmatprep.subr.mxu0 0.0
    %322 = vmatpush2.msra.mxu0 0.0
    %323 = vmatprep.subr.mxu0 0.0
    %324 = vmatpush2.msra.mxu0 0.0
    %325 = vmatprep.mubr.f32.mxu0 0.0
    %326 = vmatmul.mubr.f32.gmra.mxu0 %v37
    %v327 = vpop.f32.mrf.mxu0
    %v328 = vadd.f32 0.0, %v327
    %v329 = vpop.f32.mrf.mxu0
    %330 = vmatprep.mubr.f32.mxu0 0.0
    %331 = vmatmul.mubr.f32.gmra.mxu0 %v38
    %v332 = vpop.f32.mrf.mxu0
    %v333 = vadd.f32 0.0, %v332
    %v334 = vpop.f32.mrf.mxu0
    %335 = vmatprep.mubr.f32.mxu0 0.0
    %336 = vmatmul.mubr.f32.gmra.mxu0 %v39
    %v337 = vpop.f32.mrf.mxu0
    %v338 = vadd.f32 0.0, %v337
    %v339 = vpop.f32.mrf.mxu0
    %340 = vmatprep.mubr.f32.mxu0 0.0
    %341 = vmatmul.mubr.f32.gmra.mxu0 %v40
    %v342 = vpop.f32.mrf.mxu0
    %v343 = vadd.f32 0.0, %v342
    %v344 = vpop.f32.mrf.mxu0
    %345 = vdwg.mxu0
    %v346 = vadd.f32 %v226, %v328
    %v347 = vadd.f32 %v231, %v333
    %v348 = vadd.f32 %v236, %v338
    %v349 = vadd.f32 %v241, %v343
    %v350 = vld [vmem:[%s2] sm:$0x1]
    %v351 = vld [vmem:[%s2 + $0x1] sm:$0x1]
    %v352 = vadd.f32 %v346, %v347
    %v353 = vadd.f32 %v352, %v348
    %v354 = vadd.f32 %v353, %v349
    %v355 = vrot.slane %v354, 4
    %v356 = vadd.f32 %v354, %v355
    %v357 = vrot.slane %v356, 2
    %v358 = vadd.f32 %v356, %v357
    %v359 = vrot.slane %v358, 1
    %v360 = vadd.f32 %v358, %v359
    %v361 = vmul.f32 %v346, %v346
    %v362 = vmul.f32 %v347, %v347
    %v363 = vmul.f32 %v348, %v348
    %v364 = vmul.f32 %v349, %v349
    %v365 = vadd.f32 %v361, %v362
    %v366 = vadd.f32 %v365, %v363
    %v367 = vadd.f32 %v366, %v364
    %v368 = vrot.slane %v367, 4
    %v369 = vadd.f32 %v367, %v368
    %v370 = vrot.slane %v369, 2
    %v371 = vadd.f32 %v369, %v370
    %v372 = vrot.slane %v371, 1
    %v373 = vadd.f32 %v371, %v372
    %vm374 = vcmask 1040384
    %v375 = vsel %vm374, %v360, %v373
    %376 = vrot.lane.b32.xlu0 %v375, 8
    %v377 = vpop.permute.xlu0 %376
    %v378 = vadd.f32 %v375, %v377
    %379 = vrot.lane.b32.xlu0 %v378, 16
    %v380 = vpop.permute.xlu0 %379
    %v381 = vadd.f32 %v378, %v380
    %382 = vrot.lane.b32.xlu0 %v381, 32
    %v383 = vpop.permute.xlu0 %382
    %v384 = vadd.f32 %v381, %v383
    %385 = vrot.lane.b32.xlu0 %v384, 64
    %v386 = vpop.permute.xlu0 %385
    %v387 = vadd.f32 %v384, %v386
    %v388 = vmul.f32 %v387, 0.001953125
    %v389 = vmul.f32 %v388, %v388
    %v391 = vrot.slane %v389, 7
    %v393 = vsub.f32 %v388, %v391
    %v394 = vadd.f32 %v393, 1e-05
    %v395 = vrsqrt.pop %v394
    %v397 = vrot.slane %v395, 1
    %v399 = vmul.f32 %v350, %v397
    %v400 = vmul.f32 %v388, %v399
    %v401 = vsub.f32 %v351, %v400
    %v402 = vlaneseq
    %v403 = vshrl.u32 %v402, 7
    %v404 = vsub.s32 0, %v403
    %v405 = vrot.slane %v399, %v404
    %v406 = vmul.f32 %v346, %v405
    %v407 = vmul.f32 %v347, %v405
    %v408 = vmul.f32 %v348, %v405
    %v409 = vmul.f32 %v349, %v405
    %v410 = vlaneseq
    %v411 = vshrl.u32 %v410, 7
    %v412 = vsub.s32 0, %v411
    %v413 = vrot.slane %v401, %v412
    %v414 = vadd.f32 %v406, %v413
    %v415 = vadd.f32 %v407, %v413
    %v416 = vadd.f32 %v408, %v413
    %v417 = vadd.f32 %v409, %v413
    %v418 = vmax.f32 %v414, 0.0
    %v419 = vmax.f32 %v415, 0.0
    %v420 = vmax.f32 %v416, 0.0
    %v421 = vmax.f32 %v417, 0.0
    %422 = vst [vmem:[#allocation2 + $0x7] sm:$0x1] 0.0
    %423 = vst [vmem:[#allocation2 + $0x27] sm:$0x1] 0.0
    %424 = vst [vmem:[#allocation2 + $0x18] sm:$0x1] 0.0
    %425 = vst [vmem:[#allocation2 + $0x38] sm:$0x1] 0.0
    %426 = vst [vmem:[#allocation2 + $0x8] sm:$0xff] %v418
    %427 = vst [vmem:[#allocation2 + $0x10] sm:$0xff] %v419
    %428 = vst [vmem:[#allocation2 + $0x28] sm:$0xff] %v420
    %429 = vst [vmem:[#allocation2 + $0x30] sm:$0xff] %v421
    %v430 = vld [vmem:[#allocation2 + $0x7] sm:$0xff]
    %v431 = vld [vmem:[#allocation2 + $0xf] sm:$0xff]
    %v432 = vld [vmem:[#allocation2 + $0x27] sm:$0xff]
    %v433 = vld [vmem:[#allocation2 + $0x2f] sm:$0xff]
    %v434 = vld [vmem:[#allocation2 + $0x8] sm:$0xff]
    %v435 = vld [vmem:[#allocation2 + $0x10] sm:$0xff]
    %v436 = vld [vmem:[#allocation2 + $0x28] sm:$0xff]
    %v437 = vld [vmem:[#allocation2 + $0x30] sm:$0xff]
    %v438 = vld [vmem:[#allocation2 + $0x9] sm:$0xff]
    %v439 = vld [vmem:[#allocation2 + $0x11] sm:$0xff]
    %v440 = vld [vmem:[#allocation2 + $0x29] sm:$0xff]
    %v441 = vld [vmem:[#allocation2 + $0x31] sm:$0xff]
    %s442 = scalar_lea.vmem [#allocation3], 384
    %v443 = vld [vmem:[%s442] sm:$0xff]
    %v444 = vld [vmem:[%s442 + $0x8] sm:$0xff]
    %v445 = vld [vmem:[%s442 + $0x10] sm:$0xff]
    %v446 = vld [vmem:[%s442 + $0x18] sm:$0xff]
    %v447 = vld [vmem:[%s442 + $0x20] sm:$0xff]
    %v448 = vld [vmem:[%s442 + $0x28] sm:$0xff]
    %v449 = vld [vmem:[%s442 + $0x30] sm:$0xff]
    %v450 = vld [vmem:[%s442 + $0x38] sm:$0xff]
    %v451 = vld [vmem:[%s442 + $0x40] sm:$0xff]
    %v452 = vld [vmem:[%s442 + $0x48] sm:$0xff]
    %v453 = vld [vmem:[%s442 + $0x50] sm:$0xff]
    %v454 = vld [vmem:[%s442 + $0x58] sm:$0xff]
    %v455 = vld [vmem:[%s442 + $0x60] sm:$0xff]
    %v456 = vld [vmem:[%s442 + $0x68] sm:$0xff]
    %v457 = vld [vmem:[%s442 + $0x70] sm:$0xff]
    %v458 = vld [vmem:[%s442 + $0x78] sm:$0xff]
    %s459 = scalar_lea.vmem [#allocation3], 512
    %v460 = vld [vmem:[%s459] sm:$0xff]
    %v461 = vld [vmem:[%s459 + $0x8] sm:$0xff]
    %v462 = vld [vmem:[%s459 + $0x10] sm:$0xff]
    %v463 = vld [vmem:[%s459 + $0x18] sm:$0xff]
    %v464 = vld [vmem:[%s459 + $0x20] sm:$0xff]
    %v465 = vld [vmem:[%s459 + $0x28] sm:$0xff]
    %v466 = vld [vmem:[%s459 + $0x30] sm:$0xff]
    %v467 = vld [vmem:[%s459 + $0x38] sm:$0xff]
    %v468 = vld [vmem:[%s459 + $0x40] sm:$0xff]
    %v469 = vld [vmem:[%s459 + $0x48] sm:$0xff]
    %v470 = vld [vmem:[%s459 + $0x50] sm:$0xff]
    %v471 = vld [vmem:[%s459 + $0x58] sm:$0xff]
    %v472 = vld [vmem:[%s459 + $0x60] sm:$0xff]
    %v473 = vld [vmem:[%s459 + $0x68] sm:$0xff]
    %v474 = vld [vmem:[%s459 + $0x70] sm:$0xff]
    %v475 = vld [vmem:[%s459 + $0x78] sm:$0xff]
    %476 = vmatprep.subr.mxu0 0.0
    %477 = vmatpush1.msra.mxu0 %v475
    %478 = vmatprep.subr.mxu0 0.0
    %479 = vmatpush1.msra.mxu0 %v474
    %480 = vmatprep.subr.mxu0 0.0
    %481 = vmatpush1.msra.mxu0 %v473
    %482 = vmatprep.subr.mxu0 0.0
    %483 = vmatpush1.msra.mxu0 %v472
    %484 = vmatprep.subr.mxu0 0.0
    %485 = vmatpush1.msra.mxu0 %v471
    %486 = vmatprep.subr.mxu0 0.0
    %487 = vmatpush1.msra.mxu0 %v470
    %488 = vmatprep.subr.mxu0 0.0
    %489 = vmatpush1.msra.mxu0 %v469
    %490 = vmatprep.subr.mxu0 0.0
    %491 = vmatpush1.msra.mxu0 %v468
    %492 = vmatprep.subr.mxu0 0.0
    %493 = vmatpush1.msra.mxu0 %v467
    %494 = vmatprep.subr.mxu0 0.0
    %495 = vmatpush1.msra.mxu0 %v466
    %496 = vmatprep.subr.mxu0 0.0
    %497 = vmatpush1.msra.mxu0 %v465
    %498 = vmatprep.subr.mxu0 0.0
    %499 = vmatpush1.msra.mxu0 %v464
    %500 = vmatprep.subr.mxu0 0.0
    %501 = vmatpush1.msra.mxu0 %v463
    %502 = vmatprep.subr.mxu0 0.0
    %503 = vmatpush1.msra.mxu0 %v462
    %504 = vmatprep.subr.mxu0 0.0
    %505 = vmatpush1.msra.mxu0 %v461
    %506 = vmatprep.subr.mxu0 0.0
    %507 = vmatpush1.msra.mxu0 %v460
    %508 = vmatprep.subr.mxu0 0.0
    %509 = vmatpush2.msra.mxu0 0.0
    %510 = vmatprep.subr.mxu0 0.0
    %511 = vmatpush2.msra.mxu0 0.0
    %512 = vmatprep.subr.mxu0 0.0
    %513 = vmatpush2.msra.mxu0 0.0
    %514 = vmatprep.subr.mxu0 0.0
    %515 = vmatpush2.msra.mxu0 0.0
    %516 = vmatprep.subr.mxu0 0.0
    %517 = vmatpush2.msra.mxu0 0.0
    %518 = vmatprep.subr.mxu0 0.0
    %519 = vmatpush2.msra.mxu0 0.0
    %520 = vmatprep.subr.mxu0 0.0
    %521 = vmatpush2.msra.mxu0 0.0
    %522 = vmatprep.subr.mxu0 0.0
    %523 = vmatpush2.msra.mxu0 0.0
    %524 = vmatprep.subr.mxu0 0.0
    %525 = vmatpush2.msra.mxu0 0.0
    %526 = vmatprep.subr.mxu0 0.0
    %527 = vmatpush2.msra.mxu0 0.0
    %528 = vmatprep.subr.mxu0 0.0
    %529 = vmatpush2.msra.mxu0 0.0
    %530 = vmatprep.subr.mxu0 0.0
    %531 = vmatpush2.msra.mxu0 0.0
    %532 = vmatprep.subr.mxu0 0.0
    %533 = vmatpush2.msra.mxu0 0.0
    %534 = vmatprep.subr.mxu0 0.0
    %535 = vmatpush2.msra.mxu0 0.0
    %536 = vmatprep.subr.mxu0 0.0
    %537 = vmatpush2.msra.mxu0 0.0
    %538 = vmatprep.subr.mxu0 0.0
    %539 = vmatpush2.msra.mxu0 0.0
    %540 = vmatprep.mubr.f32.mxu0 0.0
    %541 = vmatmul.mubr.f32.gmra.mxu0 %v434
    %v542 = vpop.f32.mrf.mxu0
    %v543 = vadd.f32 0.0, %v542
    %v544 = vpop.f32.mrf.mxu0
    %545 = vmatprep.mubr.f32.mxu0 0.0
    %546 = vmatmul.mubr.f32.gmra.mxu0 %v435
    %v547 = vpop.f32.mrf.mxu0
    %v548 = vadd.f32 0.0, %v547
    %v549 = vpop.f32.mrf.mxu0
    %550 = vmatprep.mubr.f32.mxu0 0.0
    %551 = vmatmul.mubr.f32.gmra.mxu0 %v436
    %v552 = vpop.f32.mrf.mxu0
    %v553 = vadd.f32 0.0, %v552
    %v554 = vpop.f32.mrf.mxu0
    %555 = vmatprep.mubr.f32.mxu0 0.0
    %556 = vmatmul.mubr.f32.gmra.mxu0 %v437
    %v557 = vpop.f32.mrf.mxu0
    %v558 = vadd.f32 0.0, %v557
    %v559 = vpop.f32.mrf.mxu0
    %560 = vdwg.mxu0
    %561 = vmatprep.subr.mxu0 0.0
    %562 = vmatpush1.msra.mxu0 %v458
    %563 = vmatprep.subr.mxu0 0.0
    %564 = vmatpush1.msra.mxu0 %v457
    %565 = vmatprep.subr.mxu0 0.0
    %566 = vmatpush1.msra.mxu0 %v456
    %567 = vmatprep.subr.mxu0 0.0
    %568 = vmatpush1.msra.mxu0 %v455
    %569 = vmatprep.subr.mxu0 0.0
    %570 = vmatpush1.msra.mxu0 %v454
    %571 = vmatprep.subr.mxu0 0.0
    %572 = vmatpush1.msra.mxu0 %v453
    %573 = vmatprep.subr.mxu0 0.0
    %574 = vmatpush1.msra.mxu0 %v452
    %575 = vmatprep.subr.mxu0 0.0
    %576 = vmatpush1.msra.mxu0 %v451
    %577 = vmatprep.subr.mxu0 0.0
    %578 = vmatpush1.msra.mxu0 %v450
    %579 = vmatprep.subr.mxu0 0.0
    %580 = vmatpush1.msra.mxu0 %v449
    %581 = vmatprep.subr.mxu0 0.0
    %582 = vmatpush1.msra.mxu0 %v448
    %583 = vmatprep.subr.mxu0 0.0
    %584 = vmatpush1.msra.mxu0 %v447
    %585 = vmatprep.subr.mxu0 0.0
    %586 = vmatpush1.msra.mxu0 %v446
    %587 = vmatprep.subr.mxu0 0.0
    %588 = vmatpush1.msra.mxu0 %v445
    %589 = vmatprep.subr.mxu0 0.0
    %590 = vmatpush1.msra.mxu0 %v444
    %591 = vmatprep.subr.mxu0 0.0
    %592 = vmatpush1.msra.mxu0 %v443
    %593 = vmatprep.subr.mxu0 0.0
    %594 = vmatpush2.msra.mxu0 0.0
    %595 = vmatprep.subr.mxu0 0.0
    %596 = vmatpush2.msra.mxu0 0.0
    %597 = vmatprep.subr.mxu0 0.0
    %598 = vmatpush2.msra.mxu0 0.0
    %599 = vmatprep.subr.mxu0 0.0
    %600 = vmatpush2.msra.mxu0 0.0
    %601 = vmatprep.subr.mxu0 0.0
    %602 = vmatpush2.msra.mxu0 0.0
    %603 = vmatprep.subr.mxu0 0.0
    %604 = vmatpush2.msra.mxu0 0.0
    %605 = vmatprep.subr.mxu0 0.0
    %606 = vmatpush2.msra.mxu0 0.0
    %607 = vmatprep.subr.mxu0 0.0
    %608 = vmatpush2.msra.mxu0 0.0
    %609 = vmatprep.subr.mxu0 0.0
    %610 = vmatpush2.msra.mxu0 0.0
    %611 = vmatprep.subr.mxu0 0.0
    %612 = vmatpush2.msra.mxu0 0.0
    %613 = vmatprep.subr.mxu0 0.0
    %614 = vmatpush2.msra.mxu0 0.0
    %615 = vmatprep.subr.mxu0 0.0
    %616 = vmatpush2.msra.mxu0 0.0
    %617 = vmatprep.subr.mxu0 0.0
    %618 = vmatpush2.msra.mxu0 0.0
    %619 = vmatprep.subr.mxu0 0.0
    %620 = vmatpush2.msra.mxu0 0.0
    %621 = vmatprep.subr.mxu0 0.0
    %622 = vmatpush2.msra.mxu0 0.0
    %623 = vmatprep.subr.mxu0 0.0
    %624 = vmatpush2.msra.mxu0 0.0
    %625 = vmatprep.mubr.f32.mxu0 0.0
    %626 = vmatmul.mubr.f32.gmra.mxu0 %v430
    %v627 = vpop.f32.mrf.mxu0
    %v628 = vadd.f32 %v543, %v627
    %v629 = vpop.f32.mrf.mxu0
    %630 = vmatprep.mubr.f32.mxu0 0.0
    %631 = vmatmul.mubr.f32.gmra.mxu0 %v431
    %v632 = vpop.f32.mrf.mxu0
    %v633 = vadd.f32 %v548, %v632
    %v634 = vpop.f32.mrf.mxu0
    %635 = vmatprep.mubr.f32.mxu0 0.0
    %636 = vmatmul.mubr.f32.gmra.mxu0 %v432
    %v637 = vpop.f32.mrf.mxu0
    %v638 = vadd.f32 %v553, %v637
    %v639 = vpop.f32.mrf.mxu0
    %640 = vmatprep.mubr.f32.mxu0 0.0
    %641 = vmatmul.mubr.f32.gmra.mxu0 %v433
    %v642 = vpop.f32.mrf.mxu0
    %v643 = vadd.f32 %v558, %v642
    %v644 = vpop.f32.mrf.mxu0
    %645 = vdwg.mxu0
    %s646 = scalar_lea.vmem [#allocation3], 640
    %v647 = vld [vmem:[%s646] sm:$0xff]
    %v648 = vld [vmem:[%s646 + $0x8] sm:$0xff]
    %v649 = vld [vmem:[%s646 + $0x10] sm:$0xff]
    %v650 = vld [vmem:[%s646 + $0x18] sm:$0xff]
    %v651 = vld [vmem:[%s646 + $0x20] sm:$0xff]
    %v652 = vld [vmem:[%s646 + $0x28] sm:$0xff]
    %v653 = vld [vmem:[%s646 + $0x30] sm:$0xff]
    %v654 = vld [vmem:[%s646 + $0x38] sm:$0xff]
    %v655 = vld [vmem:[%s646 + $0x40] sm:$0xff]
    %v656 = vld [vmem:[%s646 + $0x48] sm:$0xff]
    %v657 = vld [vmem:[%s646 + $0x50] sm:$0xff]
    %v658 = vld [vmem:[%s646 + $0x58] sm:$0xff]
    %v659 = vld [vmem:[%s646 + $0x60] sm:$0xff]
    %v660 = vld [vmem:[%s646 + $0x68] sm:$0xff]
    %v661 = vld [vmem:[%s646 + $0x70] sm:$0xff]
    %v662 = vld [vmem:[%s646 + $0x78] sm:$0xff]
    %663 = vmatprep.subr.mxu0 0.0
    %664 = vmatpush1.msra.mxu0 %v662
    %665 = vmatprep.subr.mxu0 0.0
    %666 = vmatpush1.msra.mxu0 %v661
    %667 = vmatprep.subr.mxu0 0.0
    %668 = vmatpush1.msra.mxu0 %v660
    %669 = vmatprep.subr.mxu0 0.0
    %670 = vmatpush1.msra.mxu0 %v659
    %671 = vmatprep.subr.mxu0 0.0
    %672 = vmatpush1.msra.mxu0 %v658
    %673 = vmatprep.subr.mxu0 0.0
    %674 = vmatpush1.msra.mxu0 %v657
    %675 = vmatprep.subr.mxu0 0.0
    %676 = vmatpush1.msra.mxu0 %v656
    %677 = vmatprep.subr.mxu0 0.0
    %678 = vmatpush1.msra.mxu0 %v655
    %679 = vmatprep.subr.mxu0 0.0
    %680 = vmatpush1.msra.mxu0 %v654
    %681 = vmatprep.subr.mxu0 0.0
    %682 = vmatpush1.msra.mxu0 %v653
    %683 = vmatprep.subr.mxu0 0.0
    %684 = vmatpush1.msra.mxu0 %v652
    %685 = vmatprep.subr.mxu0 0.0
    %686 = vmatpush1.msra.mxu0 %v651
    %687 = vmatprep.subr.mxu0 0.0
    %688 = vmatpush1.msra.mxu0 %v650
    %689 = vmatprep.subr.mxu0 0.0
    %690 = vmatpush1.msra.mxu0 %v649
    %691 = vmatprep.subr.mxu0 0.0
    %692 = vmatpush1.msra.mxu0 %v648
    %693 = vmatprep.subr.mxu0 0.0
    %694 = vmatpush1.msra.mxu0 %v647
    %695 = vmatprep.subr.mxu0 0.0
    %696 = vmatpush2.msra.mxu0 0.0
    %697 = vmatprep.subr.mxu0 0.0
    %698 = vmatpush2.msra.mxu0 0.0
    %699 = vmatprep.subr.mxu0 0.0
    %700 = vmatpush2.msra.mxu0 0.0
    %701 = vmatprep.subr.mxu0 0.0
    %702 = vmatpush2.msra.mxu0 0.0
    %703 = vmatprep.subr.mxu0 0.0
    %704 = vmatpush2.msra.mxu0 0.0
    %705 = vmatprep.subr.mxu0 0.0
    %706 = vmatpush2.msra.mxu0 0.0
    %707 = vmatprep.subr.mxu0 0.0
    %708 = vmatpush2.msra.mxu0 0.0
    %709 = vmatprep.subr.mxu0 0.0
    %710 = vmatpush2.msra.mxu0 0.0
    %711 = vmatprep.subr.mxu0 0.0
    %712 = vmatpush2.msra.mxu0 0.0
    %713 = vmatprep.subr.mxu0 0.0
    %714 = vmatpush2.msra.mxu0 0.0
    %715 = vmatprep.subr.mxu0 0.0
    %716 = vmatpush2.msra.mxu0 0.0
    %717 = vmatprep.subr.mxu0 0.0
    %718 = vmatpush2.msra.mxu0 0.0
    %719 = vmatprep.subr.mxu0 0.0
    %720 = vmatpush2.msra.mxu0 0.0
    %721 = vmatprep.subr.mxu0 0.0
    %722 = vmatpush2.msra.mxu0 0.0
    %723 = vmatprep.subr.mxu0 0.0
    %724 = vmatpush2.msra.mxu0 0.0
    %725 = vmatprep.subr.mxu0 0.0
    %726 = vmatpush2.msra.mxu0 0.0
    %727 = vmatprep.mubr.f32.mxu0 0.0
    %728 = vmatmul.mubr.f32.gmra.mxu0 %v438
    %v729 = vpop.f32.mrf.mxu0
    %v730 = vadd.f32 0.0, %v729
    %v731 = vpop.f32.mrf.mxu0
    %732 = vmatprep.mubr.f32.mxu0 0.0
    %733 = vmatmul.mubr.f32.gmra.mxu0 %v439
    %v734 = vpop.f32.mrf.mxu0
    %v735 = vadd.f32 0.0, %v734
    %v736 = vpop.f32.mrf.mxu0
    %737 = vmatprep.mubr.f32.mxu0 0.0
    %738 = vmatmul.mubr.f32.gmra.mxu0 %v440
    %v739 = vpop.f32.mrf.mxu0
    %v740 = vadd.f32 0.0, %v739
    %v741 = vpop.f32.mrf.mxu0
    %742 = vmatprep.mubr.f32.mxu0 0.0
    %743 = vmatmul.mubr.f32.gmra.mxu0 %v441
    %v744 = vpop.f32.mrf.mxu0
    %v745 = vadd.f32 0.0, %v744
    %v746 = vpop.f32.mrf.mxu0
    %747 = vdwg.mxu0
    %v748 = vadd.f32 %v628, %v730
    %v749 = vadd.f32 %v633, %v735
    %v750 = vadd.f32 %v638, %v740
    %v751 = vadd.f32 %v643, %v745
    %v752 = vld [vmem:[%s2 + $0x2] sm:$0x1]
    %v753 = vld [vmem:[%s2 + $0x3] sm:$0x1]
    %v754 = vadd.f32 %v748, %v749
    %v755 = vadd.f32 %v754, %v750
    %v756 = vadd.f32 %v755, %v751
    %v757 = vrot.slane %v756, 4
    %v758 = vadd.f32 %v756, %v757
    %v759 = vrot.slane %v758, 2
    %v760 = vadd.f32 %v758, %v759
    %v761 = vrot.slane %v760, 1
    %v762 = vadd.f32 %v760, %v761
    %v763 = vmul.f32 %v748, %v748
    %v764 = vmul.f32 %v749, %v749
    %v765 = vmul.f32 %v750, %v750
    %v766 = vmul.f32 %v751, %v751
    %v767 = vadd.f32 %v763, %v764
    %v768 = vadd.f32 %v767, %v765
    %v769 = vadd.f32 %v768, %v766
    %v770 = vrot.slane %v769, 4
    %v771 = vadd.f32 %v769, %v770
    %v772 = vrot.slane %v771, 2
    %v773 = vadd.f32 %v771, %v772
    %v774 = vrot.slane %v773, 1
    %v775 = vadd.f32 %v773, %v774
    %v776 = vsel %vm374, %v762, %v775
    %777 = vrot.lane.b32.xlu0 %v776, 8
    %v778 = vpop.permute.xlu0 %777
    %v779 = vadd.f32 %v776, %v778
    %780 = vrot.lane.b32.xlu0 %v779, 16
    %v781 = vpop.permute.xlu0 %780
    %v782 = vadd.f32 %v779, %v781
    %783 = vrot.lane.b32.xlu0 %v782, 32
    %v784 = vpop.permute.xlu0 %783
    %v785 = vadd.f32 %v782, %v784
    %786 = vrot.lane.b32.xlu0 %v785, 64
    %v787 = vpop.permute.xlu0 %786
    %v788 = vadd.f32 %v785, %v787
    %v789 = vmul.f32 %v788, 0.001953125
    %v790 = vmul.f32 %v789, %v789
    %v792 = vrot.slane %v790, 7
    %v794 = vsub.f32 %v789, %v792
    %v795 = vadd.f32 %v794, 1e-05
    %v796 = vrsqrt.pop %v795
    %v798 = vrot.slane %v796, 1
    %v800 = vmul.f32 %v752, %v798
    %v801 = vmul.f32 %v789, %v800
    %v802 = vsub.f32 %v753, %v801
    %v803 = vlaneseq
    %v804 = vshrl.u32 %v803, 7
    %v805 = vsub.s32 0, %v804
    %v806 = vrot.slane %v800, %v805
    %v807 = vmul.f32 %v748, %v806
    %v808 = vmul.f32 %v749, %v806
    %v809 = vmul.f32 %v750, %v806
    %v810 = vmul.f32 %v751, %v806
    %v811 = vlaneseq
    %v812 = vshrl.u32 %v811, 7
    %v813 = vsub.s32 0, %v812
    %v814 = vrot.slane %v802, %v813
    %v815 = vadd.f32 %v807, %v814
    %v816 = vadd.f32 %v808, %v814
    %v817 = vadd.f32 %v809, %v814
    %v818 = vadd.f32 %v810, %v814
    %v819 = vadd.f32 %v33, %v815
    %v820 = vadd.f32 %v34, %v816
    %v821 = vadd.f32 %v35, %v817
    %v822 = vadd.f32 %v36, %v818
    %823 = vst [vmem:[#allocation6] sm:$0xff] %v819
    %824 = vst [vmem:[#allocation6 + $0x8] sm:$0xff] %v820
    %825 = vst [vmem:[#allocation6 + $0x10] sm:$0xff] %v821
    %826 = vst [vmem:[#allocation6 + $0x18] sm:$0xff] %v822
    // Predicated region
    $region18: #{tpu_custom_call.1} parent=1 // pred_check
      _
    $region19: #{tpu_custom_call.1} parent=1 // pred_check_branch
      %828 = sbr.rel (0) target = $region21
    $region20: #{tpu_custom_call.1} parent=1 // pred_region
      %s830 = ssub.s32 512, 512
      %831 = vsyncadd [#allocation5], %s830
      %s832 = sshll.u32 [#allocation6], 4
      %s833 = int_to_ptr.vmem [resolvable:$true] %s832
      %838 = dma.vmem_to_hbm [thread:$0]  %s833, 512, %s3, [#allocation5], 128, 128, 8
    $region21: #{tpu_custom_call.1} parent=1 // pred_fallthru
      _
    // Predicated region
    $region22: #{tpu_custom_call.1} parent=1 // pred_check
      _
    $region23: #{tpu_custom_call.1} parent=1 // pred_check_branch
      %840 = sbr.rel (0) target = $region25
    $region24: #{tpu_custom_call.1} parent=1 // pred_region
      %841 = dma.done [#allocation5], 512
    $region25: #{tpu_custom_call.1} parent=1 // pred_fallthru
      _
    %842 = vsyncpa [#allocation4], 1
    %843 = vsyncpa [#allocation5], 1

</llo_original>
